<compile_context>
chip_gen: v5e
topology: v5e:2x2
jax: 0.10.0
libtpu: 0.0.40
codegen_flags: <defaults>
</compile_context>

<pallas_src>
import functools

import jax
import jax.numpy as jnp
from jax.experimental import pallas as pl
from jax.experimental.pallas import tpu as pltpu


def _round_up(a, b):
    return (a + b - 1) // b * b


def _layer1_kernel(adj_ref, x_ref, w1_ref, b1_ref, h_ref):
    # adj_ref: [tm, Np] bf16, x_ref: [Np, Fp] bf16, w1_ref: [Fp, Hp] bf16,
    # b1_ref: [1, Hp] f32, h_ref: [tm, Hp] bf16
    ax = jnp.dot(adj_ref[...], x_ref[...],
                 preferred_element_type=jnp.float32)          # [tm, Fp] f32 acc
    h = jnp.dot(ax.astype(jnp.bfloat16), w1_ref[...],
                preferred_element_type=jnp.float32)           # [tm, Hp] f32 acc
    h = jnp.maximum(h + b1_ref[...], 0.0)                     # f32 elementwise
    h_ref[...] = h.astype(h_ref.dtype)


def _layer2_kernel(adj_ref, h_ref, w2_ref, b2_ref, out_ref, *, c_real):
    # adj_ref: [tm, Np] bf16, h_ref: [Np, Hp] bf16, w2_ref: [Hp, Cp] bf16,
    # b2_ref: [1, Cp] f32, out_ref: [tm, Cp] f32
    ah = jnp.dot(adj_ref[...], h_ref[...],
                 preferred_element_type=jnp.float32)          # [tm, Hp]
    logits = jnp.dot(ah.astype(jnp.bfloat16), w2_ref[...],
                     preferred_element_type=jnp.float32)      # [tm, Cp]
    logits = logits + b2_ref[...]
    # Mask padded class columns so they do not affect the softmax denominator.
    col = jax.lax.broadcasted_iota(jnp.int32, logits.shape, 1)
    logits = jnp.where(col < c_real, logits, -1e30)
    # Numerically-stable log_softmax over dim=1 (all f32).
    m = jnp.max(logits, axis=1, keepdims=True)
    shifted = logits - m
    lse = jnp.log(jnp.sum(jnp.exp(shifted), axis=1, keepdims=True))
    out_ref[...] = (shifted - lse).astype(out_ref.dtype)


def gcn_forward(x, adj, w1, b1, w2, b2):
    """x: [N, F], adj: [N, N], w1: [H, F], b1: [H], w2: [C, H], b2: [C]."""
    n, f = x.shape
    hdim = w1.shape[0]
    c = w2.shape[0]

    LANE = 128
    # Row tile: multiple of 8 sublanes; 256-aligned at real graph sizes (MXU).
    if n <= 256:
        tm = _round_up(n, 8)
        n_pad = tm
    else:
        tm = 256
        n_pad = _round_up(n, tm)
    f_pad = _round_up(f, LANE)
    h_pad = _round_up(hdim, LANE)
    c_pad = _round_up(c, LANE)

    # Pad + cast.  adj is a 0/1(+self-loop) mask so bf16 is exact; weights bf16,
    # biases stay f32.  Padded rows/cols are zero so real outputs are unchanged.
    bf = jnp.bfloat16
    adj_p = jnp.zeros((n_pad, n_pad), bf).at[:n, :n].set(adj.astype(bf))
    x_p = jnp.zeros((n_pad, f_pad), bf).at[:n, :f].set(x.astype(bf))
    w1_p = jnp.zeros((f_pad, h_pad), bf).at[:f, :hdim].set(w1.T.astype(bf))
    b1_p = jnp.zeros((1, h_pad), jnp.float32).at[0, :hdim].set(b1.astype(jnp.float32))
    w2_p = jnp.zeros((h_pad, c_pad), bf).at[:hdim, :c].set(w2.T.astype(bf))
    b2_p = jnp.zeros((1, c_pad), jnp.float32).at[0, :c].set(b2.astype(jnp.float32))

    grid = (n_pad // tm,)
    cparams = pltpu.CompilerParams(
        dimension_semantics=("parallel",),       # megacore split on v7x
        vmem_limit_bytes=48 * 1024 * 1024,       # within v7x 64 MiB physical VMEM
    )

    adj_spec = pl.BlockSpec((tm, n_pad), lambda i: (i, 0))      # row-tiled, DMA pipelined

    def full_spec(shape):
        return pl.BlockSpec(shape, lambda i: (0, 0))            # resident across grid

    # ---- Kernel A: h = relu((adj @ x) @ W1 + b1) ----
    cost1 = pl.CostEstimate(
        flops=2 * n_pad * n_pad * f_pad + 2 * n_pad * f_pad * h_pad,
        transcendentals=0,
        bytes_accessed=(adj_p.size * 2 + x_p.size * 2 + w1_p.size * 2
                        + b1_p.size * 4 + n_pad * h_pad * 2),
    )
    h_full = pl.pallas_call(
        _layer1_kernel,
        out_shape=jax.ShapeDtypeStruct((n_pad, h_pad), jnp.bfloat16),
        grid=grid,
        in_specs=[adj_spec,
                  full_spec((n_pad, f_pad)),
                  full_spec((f_pad, h_pad)),
                  full_spec((1, h_pad))],
        out_specs=pl.BlockSpec((tm, h_pad), lambda i: (i, 0)),
        compiler_params=cparams,
        cost_estimate=cost1,
    )(adj_p, x_p, w1_p, b1_p)

    # ---- Kernel B: out = log_softmax((adj @ h) @ W2 + b2) ----
    cost2 = pl.CostEstimate(
        flops=2 * n_pad * n_pad * h_pad + 2 * n_pad * h_pad * c_pad,
        transcendentals=n_pad * c_pad,
        bytes_accessed=(adj_p.size * 2 + n_pad * h_pad * 2 + w2_p.size * 2
                        + b2_p.size * 4 + n_pad * c_pad * 4),
    )
    out_pad = pl.pallas_call(
        functools.partial(_layer2_kernel, c_real=c),
        out_shape=jax.ShapeDtypeStruct((n_pad, c_pad), jnp.float32),
        grid=grid,
        in_specs=[adj_spec,
                  full_spec((n_pad, h_pad)),
                  full_spec((h_pad, c_pad)),
                  full_spec((1, c_pad))],
        out_specs=pl.BlockSpec((tm, c_pad), lambda i: (i, 0)),  # lane-dense [tm,128] output
        compiler_params=cparams,
        cost_estimate=cost2,
    )(adj_p, h_full, w2_p, b2_p)

    return out_pad[:n, :c]


if __name__ == "__main__":
    # Small shapes consistent with the module: N nodes, in_features, hidden, classes.
    N, F_IN, HID, CLS = 8, 16, 32, 4

    key = jax.random.PRNGKey(0)
    kx, kadj, kw1, kb1, kw2, kb2 = jax.random.split(key, 6)

    x = jax.random.normal(kx, (N, F_IN), dtype=jnp.float32)
    # Dense 0/1 "adjacency" with self-loops (spmm treated as dense matmul).
    adj = (jax.random.uniform(kadj, (N, N)) > 0.5).astype(jnp.float32)
    adj = adj + jnp.eye(N, dtype=jnp.float32)

    # PyTorch Linear parameter shapes: W [out, in], b [out].
    w1 = jax.random.normal(kw1, (HID, F_IN), dtype=jnp.float32) * 0.1
    b1 = jax.random.normal(kb1, (HID,), dtype=jnp.float32) * 0.1
    w2 = jax.random.normal(kw2, (CLS, HID), dtype=jnp.float32) * 0.1
    b2 = jax.random.normal(kb2, (CLS,), dtype=jnp.float32) * 0.1

    out = gcn_forward(x, adj, w1, b1, w2, b2)
    jax.block_until_ready(out)

    # Reference 1: mirrors the kernel's bf16-operand / f32-accumulate math (tight).
    def ref_bf16():
        b = jnp.bfloat16
        ax = jnp.dot(adj.astype(b), x.astype(b), preferred_element_type=jnp.float32)
        h = jnp.maximum(
            jnp.dot(ax.astype(b), w1.T.astype(b), preferred_element_type=jnp.float32) + b1, 0.0)
        ah = jnp.dot(adj.astype(b), h.astype(b), preferred_element_type=jnp.float32)
        logits = jnp.dot(ah.astype(b), w2.T.astype(b), preferred_element_type=jnp.float32) + b2
        return logits - jax.scipy.special.logsumexp(logits, axis=1, keepdims=True)

    # Reference 2: full-precision f32 math of the original module (loose, bf16 rounding).
    def ref_f32():
        ax = adj @ x
        h = jnp.maximum(ax @ w1.T + b1, 0.0)
        logits = (adj @ h) @ w2.T + b2
        return logits - jax.scipy.special.logsumexp(logits, axis=1, keepdims=True)

    r_bf16 = ref_bf16()
    r_f32 = ref_f32()
    assert jnp.allclose(out, r_bf16, atol=2e-2, rtol=2e-2), "mismatch vs bf16-mirrored reference"
    assert jnp.allclose(out, r_f32, atol=1.5e-1, rtol=1e-1), "mismatch vs f32 reference"

    print("KERNEL_OK")
</pallas_src>

<mosaic_0001>
module attributes {stable_mosaic.version = 11 : i64} {
  func.func @_layer1_kernel(%arg0: i32, %arg1: memref<8x8xbf16, #tpu.memory_space<vmem>>, %arg2: memref<8x128xbf16, #tpu.memory_space<vmem>>, %arg3: memref<128x128xbf16, #tpu.memory_space<vmem>>, %arg4: memref<1x128xf32, #tpu.memory_space<vmem>>, %arg5: memref<8x128xbf16, #tpu.memory_space<vmem>>) attributes {dimension_semantics = [#tpu.dimension_semantics<parallel>], iteration_bounds = array<i64: 1>, scalar_prefetch = 0 : i64, scratch_operands = 0 : i64, tpu.core_type = #tpu.core_type<tc>, window_params = [{transform_indices = @transform_0, window_bounds = array<i64: 8, 8>}, {pipeline_mode = #tpu.pipeline_mode<synchronous>, transform_indices = @transform_1, window_bounds = array<i64: 8, 128>}, {pipeline_mode = #tpu.pipeline_mode<synchronous>, transform_indices = @transform_2, window_bounds = array<i64: 128, 128>}, {pipeline_mode = #tpu.pipeline_mode<synchronous>, transform_indices = @transform_3, window_bounds = array<i64: 1, 128>}, {transform_indices = @transform_4, window_bounds = array<i64: 8, 128>}]} {
    %c0 = arith.constant 0 : index
    %c0_0 = arith.constant 0 : index
    %0 = vector.load %arg1[%c0, %c0_0] : memref<8x8xbf16, #tpu.memory_space<vmem>>, vector<8x8xbf16>
    %c0_1 = arith.constant 0 : index
    %c0_2 = arith.constant 0 : index
    %1 = vector.load %arg2[%c0_1, %c0_2] : memref<8x128xbf16, #tpu.memory_space<vmem>>, vector<8x128xbf16>
    %cst = arith.constant dense<0.000000e+00> : vector<8x128xf32>
    %2 = tpu.matmul %0, %1, %cst {dimension_numbers = #tpu.dot_dimension_numbers<[1], [0], [0], [1], [0, 0, 1, 1], [], []>} : vector<8x8xbf16>, vector<8x128xbf16>, vector<8x128xf32> -> vector<8x128xf32>
    %3 = arith.truncf %2 : vector<8x128xf32> to vector<8x128xbf16>
    %c0_3 = arith.constant 0 : index
    %c0_4 = arith.constant 0 : index
    %4 = vector.load %arg3[%c0_3, %c0_4] : memref<128x128xbf16, #tpu.memory_space<vmem>>, vector<128x128xbf16>
    %cst_5 = arith.constant dense<0.000000e+00> : vector<8x128xf32>
    %5 = tpu.matmul %3, %4, %cst_5 {dimension_numbers = #tpu.dot_dimension_numbers<[1], [0], [0], [1], [0, 0, 1, 1], [], []>} : vector<8x128xbf16>, vector<128x128xbf16>, vector<8x128xf32> -> vector<8x128xf32>
    %c0_6 = arith.constant 0 : index
    %c0_7 = arith.constant 0 : index
    %6 = vector.load %arg4[%c0_6, %c0_7] : memref<1x128xf32, #tpu.memory_space<vmem>>, vector<1x128xf32>
    %7 = vector.broadcast %6 : vector<1x128xf32> to vector<8x128xf32>
    %8 = arith.addf %5, %7 : vector<8x128xf32>
    %cst_8 = arith.constant 0.000000e+00 : f32
    %9 = vector.broadcast %cst_8 : f32 to vector<8x128xf32>
    %10 = arith.maximumf %8, %9 : vector<8x128xf32>
    %11 = arith.truncf %10 : vector<8x128xf32> to vector<8x128xbf16>
    %c0_9 = arith.constant 0 : index
    %c0_10 = arith.constant 0 : index
    %12 = vector.load %arg5[%c0_9, %c0_10] : memref<8x128xbf16, #tpu.memory_space<vmem>>, vector<8x128xbf16>
    tpu.vector_store %arg5[%c0_9, %c0_10], %11 {strides = array<i32>} : memref<8x128xbf16, #tpu.memory_space<vmem>>, vector<8x128xbf16>,
    return
  }
  func.func @transform_0(%arg0: i32) -> (i32, i32) {
    %c0_i32 = arith.constant 0 : i32
    %c0_i32_0 = arith.constant 0 : i32
    return %arg0, %c0_i32 : i32, i32
  }
  func.func @transform_1(%arg0: i32) -> (i32, i32) {
    %c0_i32 = arith.constant 0 : i32
    %c0_i32_0 = arith.constant 0 : i32
    %c0_i32_1 = arith.constant 0 : i32
    return %c0_i32, %c0_i32_0 : i32, i32
  }
  func.func @transform_2(%arg0: i32) -> (i32, i32) {
    %c0_i32 = arith.constant 0 : i32
    %c0_i32_0 = arith.constant 0 : i32
    %c0_i32_1 = arith.constant 0 : i32
    return %c0_i32, %c0_i32_0 : i32, i32
  }
  func.func @transform_3(%arg0: i32) -> (i32, i32) {
    %c0_i32 = arith.constant 0 : i32
    %c0_i32_0 = arith.constant 0 : i32
    %c0_i32_1 = arith.constant 0 : i32
    return %c0_i32, %c0_i32_0 : i32, i32
  }
  func.func @transform_4(%arg0: i32) -> (i32, i32) {
    %c0_i32 = arith.constant 0 : i32
    %c0_i32_0 = arith.constant 0 : i32
    return %arg0, %c0_i32 : i32, i32
  }
}

</mosaic_0001>

<llo_original>
// kernel: tpu_custom_call.1
$region0: #{tpu_custom_call.1}
  #allocation0 [shape = 'u32[]', space=smem, size = 0x4, offset = 0x4, fixed_abs, tag = 'smem constant byte address 0x4 - core index']
  #allocation1 [shape = 'u32[72,128]{1,0:T(1,128)}', space=vmem, size = 0x9000, scoped, tag = 'internal scratch']
  %s0 = inlined_call_operand.hbm [shape: bf16[8,8], index: 0, kind: input, shape index: {}]
  %s1 = inlined_call_operand.hbm [shape: bf16[8,128], index: 1, kind: input, shape index: {}]
  %s2 = inlined_call_operand.hbm [shape: bf16[128,128], index: 2, kind: input, shape index: {}]
  %s3 = inlined_call_operand.vmem [shape: f32[1,128], index: 3, kind: input, shape index: {}]
  %s4 = inlined_call_operand.hbm [shape: bf16[8,128], index: 4, kind: output, shape index: {}]
  %s5 = sld [smem:[#allocation0]]
  $region38: #{tpu_custom_call.1} parent=0
    _
  %s7 = ssub.s32 1, %s5
  %s8 = scalar_select 0, %s7, %s5
  $region1: #{tpu_custom_call.1} parent=0
    #allocation2 [shape = 'u8[2048]{0}', space=vmem, size = 0x800, scoped, tag = 'input window, operand 0, single buffered']
    #allocation3 [shape = 's32[1]{0}', space=sflag, size = 0x4, scoped, tag = 'scoped memory for tpu_custom_call.1']
    #allocation4 [shape = 's32[1]{0}', space=sflag, size = 0x4, scoped, tag = 'scoped memory for tpu_custom_call.1']
    #allocation5 [shape = 'u8[2048]{0}', space=vmem, size = 0x800, scoped, tag = 'input window, operand 1, single buffered']
    #allocation6 [shape = 's32[1]{0}', space=sflag, size = 0x4, scoped, tag = 'scoped memory for tpu_custom_call.1']
    #allocation7 [shape = 'u8[32768]{0}', space=vmem, size = 0x8000, scoped, tag = 'input window, operand 2, single buffered']
    #allocation8 [shape = 'u8[2048]{0}', space=vmem, size = 0x800, scoped, tag = 'output window, operand 0, single buffered']
    %9 = vsyncpa [#allocation3], 0
    %10 = vsyncpa [#allocation6], 0
    %11 = vsyncpa [#allocation4], 0
    // Predicated region
    $region2: #{tpu_custom_call.1} parent=1 // pred_check
      _
    $region3: #{tpu_custom_call.1} parent=1 // pred_check_branch
      %13 = sbr.rel (0) target = $region5
    $region4: #{tpu_custom_call.1} parent=1 // pred_region
      %15 = vsyncadd [#allocation3], 0
      %s17 = sshll.u32 %s0, 4
      %s18 = int_to_ptr.hbm [resolvable:$true] %s17
      %s19 = sshll.u32 [#allocation2], 4
      %s20 = int_to_ptr.vmem [resolvable:$true] %s19
      %22 = dma.hbm_to_vmem [thread:$0]  %s18, 64, %s20, [#allocation3]
    $region5: #{tpu_custom_call.1} parent=1 // pred_fallthru
      _
    // Predicated region
    $region6: #{tpu_custom_call.1} parent=1 // pred_check
      _
    $region7: #{tpu_custom_call.1} parent=1 // pred_check_branch
      %24 = sbr.rel (0) target = $region9
    $region8: #{tpu_custom_call.1} parent=1 // pred_region
      %26 = vsyncadd [#allocation6], 0
      %s28 = sshll.u32 %s1, 4
      %s29 = int_to_ptr.hbm [resolvable:$true] %s28
      %s30 = sshll.u32 [#allocation5], 4
      %s31 = int_to_ptr.vmem [resolvable:$true] %s30
      %33 = dma.hbm_to_vmem [thread:$0]  %s29, 64, %s31, [#allocation6]
    $region9: #{tpu_custom_call.1} parent=1 // pred_fallthru
      _
    // Predicated region
    $region10: #{tpu_custom_call.1} parent=1 // pred_check
      _
    $region11: #{tpu_custom_call.1} parent=1 // pred_check_branch
      %35 = sbr.rel (0) target = $region13
    $region12: #{tpu_custom_call.1} parent=1 // pred_region
      %37 = vsyncadd [#allocation6], 0
      %s38 = sshll.u32 %s2, 4
      %s39 = int_to_ptr.hbm [resolvable:$true] %s38
      %s40 = sshll.u32 [#allocation7], 4
      %s41 = int_to_ptr.vmem [resolvable:$true] %s40
      %46 = dma.hbm_to_vmem [thread:$0]  %s39, 1024, %s41, [#allocation6], 64, 64, 4
    $region13: #{tpu_custom_call.1} parent=1 // pred_fallthru
      _
    // Predicated region
    $region14: #{tpu_custom_call.1} parent=1 // pred_check
      _
    $region15: #{tpu_custom_call.1} parent=1 // pred_check_branch
      %48 = sbr.rel (0) target = $region17
    $region16: #{tpu_custom_call.1} parent=1 // pred_region
      _
    $region17: #{tpu_custom_call.1} parent=1 // pred_fallthru
      _
    // Predicated region
    $region18: #{tpu_custom_call.1} parent=1 // pred_check
      _
    $region19: #{tpu_custom_call.1} parent=1 // pred_check_branch
      %50 = sbr.rel (0) target = $region21
    $region20: #{tpu_custom_call.1} parent=1 // pred_region
      %52 = dma.done [#allocation3], 64
    $region21: #{tpu_custom_call.1} parent=1 // pred_fallthru
      _
    // Predicated region
    $region22: #{tpu_custom_call.1} parent=1 // pred_check
      _
    $region23: #{tpu_custom_call.1} parent=1 // pred_check_branch
      %54 = sbr.rel (0) target = $region25
    $region24: #{tpu_custom_call.1} parent=1 // pred_region
      %56 = dma.done [#allocation6], 64
    $region25: #{tpu_custom_call.1} parent=1 // pred_fallthru
      _
    // Predicated region
    $region26: #{tpu_custom_call.1} parent=1 // pred_check
      _
    $region27: #{tpu_custom_call.1} parent=1 // pred_check_branch
      %58 = sbr.rel (0) target = $region29
    $region28: #{tpu_custom_call.1} parent=1 // pred_region
      %60 = dma.done [#allocation6], 1024
    $region29: #{tpu_custom_call.1} parent=1 // pred_fallthru
      _
    %v62 = vld [vmem:[#allocation2] sm:$0xf]
    %v63 = vld [vmem:[#allocation5] sm:$0xf]
    %vm64 = vcmask 64512
    %v66 = vsel %vm64, %v62, 0
    %vm68 = vcmask 1043456
    %v70 = vsel %vm68, %v63, 0
    %72 = vmatpush.bf16.msra.mxu0 0
    %73 = vmatpush.bf16.msra.mxu0 0
    %74 = vmatpush.bf16.msra.mxu0 0
    %75 = vmatpush.bf16.msra.mxu0 0
    %76 = vmatpush.bf16.msra.mxu0 0
    %77 = vmatpush.bf16.msra.mxu0 0
    %78 = vmatpush.bf16.msra.mxu0 0
    %79 = vmatpush.bf16.msra.mxu0 %v70
    %80 = vmatmul.bf16.gmra.mxu0 %v66
    %v81 = vpop.f32.mrf.mxu0
    %v82 = vadd.f32 0.0, %v81
    %v83 = vpop.f32.mrf.mxu0
    %84 = vdwg.mxu0
    %v85 = vpack.c.bf16 %v82, %v82
    %v86 = vld [vmem:[#allocation7] sm:$0xf]
    %v87 = vld [vmem:[#allocation7 + $0x4] sm:$0xf]
    %v88 = vld [vmem:[#allocation7 + $0x8] sm:$0xf]
    %v89 = vld [vmem:[#allocation7 + $0xc] sm:$0xf]
    %v90 = vld [vmem:[#allocation7 + $0x10] sm:$0xf]
    %v91 = vld [vmem:[#allocation7 + $0x14] sm:$0xf]
    %v92 = vld [vmem:[#allocation7 + $0x18] sm:$0xf]
    %v93 = vld [vmem:[#allocation7 + $0x1c] sm:$0xf]
    %v94 = vld [vmem:[#allocation7 + $0x20] sm:$0xf]
    %v95 = vld [vmem:[#allocation7 + $0x24] sm:$0xf]
    %v96 = vld [vmem:[#allocation7 + $0x28] sm:$0xf]
    %v97 = vld [vmem:[#allocation7 + $0x2c] sm:$0xf]
    %v98 = vld [vmem:[#allocation7 + $0x30] sm:$0xf]
    %v99 = vld [vmem:[#allocation7 + $0x34] sm:$0xf]
    %v100 = vld [vmem:[#allocation7 + $0x38] sm:$0xf]
    %v101 = vld [vmem:[#allocation7 + $0x3c] sm:$0xf]
    %v102 = vld [vmem:[%s3] sm:$0x1]
    %v104 = vperm.slane %v102, 0
    %v122 = vunpack.c.l.b16 %v86
    %v123 = vunpack.c.l.b16 %v87
    %v124 = vunpack.c.l.b16 %v88
    %v125 = vunpack.c.l.b16 %v89
    %v126 = vunpack.c.l.b16 %v90
    %v127 = vunpack.c.l.b16 %v91
    %v128 = vunpack.c.l.b16 %v92
    %v129 = vunpack.c.l.b16 %v93
    %v130 = vunpack.c.l.b16 %v94
    %v131 = vunpack.c.l.b16 %v95
    %v132 = vunpack.c.l.b16 %v96
    %v133 = vunpack.c.l.b16 %v97
    %v134 = vunpack.c.l.b16 %v98
    %v135 = vunpack.c.l.b16 %v99
    %v136 = vunpack.c.l.b16 %v100
    %v137 = vunpack.c.l.b16 %v101
    %v138 = vpack.c.b16 %v123, %v122
    %v139 = vpack.c.b16 %v125, %v124
    %v140 = vpack.c.b16 %v127, %v126
    %v141 = vpack.c.b16 %v129, %v128
    %v142 = vpack.c.b16 %v131, %v130
    %v143 = vpack.c.b16 %v133, %v132
    %v144 = vpack.c.b16 %v135, %v134
    %v145 = vpack.c.b16 %v137, %v136
    %154 = vmatpush.bf16.msra.mxu0 %v145
    %155 = vmatpush.bf16.msra.mxu0 %v144
    %156 = vmatpush.bf16.msra.mxu0 %v143
    %157 = vmatpush.bf16.msra.mxu0 %v142
    %158 = vmatpush.bf16.msra.mxu0 %v141
    %159 = vmatpush.bf16.msra.mxu0 %v140
    %160 = vmatpush.bf16.msra.mxu0 %v139
    %161 = vmatpush.bf16.msra.mxu0 %v138
    %162 = vmatmul.bf16.gmra.mxu0 %v85
    %v163 = vpop.f32.mrf.mxu0
    %v164 = vadd.f32 %v104, %v163
    %v165 = vpop.f32.mrf.mxu0
    %166 = vdwg.mxu0
    %v167 = vmax.f32 %v164, 0.0
    %v168 = vpack.c.bf16 %v167, %v167
    %169 = vst [vmem:[#allocation8] sm:$0xf] %v168
    // Predicated region
    $region30: #{tpu_custom_call.1} parent=1 // pred_check
      _
    $region31: #{tpu_custom_call.1} parent=1 // pred_check_branch
      %171 = sbr.rel (0) target = $region33
    $region32: #{tpu_custom_call.1} parent=1 // pred_region
      %173 = vsyncadd [#allocation4], 0
      %s175 = sshll.u32 [#allocation8], 4
      %s176 = int_to_ptr.vmem [resolvable:$true] %s175
      %s177 = sshll.u32 %s4, 4
      %s178 = int_to_ptr.hbm [resolvable:$true] %s177
      %180 = dma.vmem_to_hbm [thread:$0]  %s176, 64, %s178, [#allocation4]
    $region33: #{tpu_custom_call.1} parent=1 // pred_fallthru
      _
    // Predicated region
    $region34: #{tpu_custom_call.1} parent=1 // pred_check
      _
    $region35: #{tpu_custom_call.1} parent=1 // pred_check_branch
      %182 = sbr.rel (0) target = $region37
    $region36: #{tpu_custom_call.1} parent=1 // pred_region
      %184 = dma.done [#allocation4], 64
    $region37: #{tpu_custom_call.1} parent=1 // pred_fallthru
      _
    %185 = vsyncpa [#allocation3], 1
    %186 = vsyncpa [#allocation6], 1
    %187 = vsyncpa [#allocation4], 1

</llo_original>
